<compile_context>
chip_gen: v7x
topology: tpu7x:2x2x1
jax: 0.10.0
libtpu: 0.0.40
codegen_flags: <defaults>
</compile_context>

<pallas_src>
import functools
import math

import jax
import jax.numpy as jnp
from jax import lax
from jax.experimental import pallas as pl
from jax.experimental.pallas import tpu as pltpu


def _round_up(v, m):
    return -(-v // m) * m


def _tconv_kernel(*refs, kt, c_in, c_out, gate_off, n_nodes, out_lanes, act,
                  has_halo, has_stack):
    """Fused temporal conv (+folded align/residual) + activation for one block.

    refs = (xm, [xh], w, b, o, [xs])
      xm : (c_in, L)   main input window, lanes = flattened (time, node)
      xh : (c_in, (kt-1)*N)  halo: next kt-1 time rows (tiled mode, kt > 1)
      w  : (c_rows, kt*c_in) K-stacked conv weights (align folded into dt = kt-1)
      b  : (c_rows, 1)       merged bias (f32)
      o  : (c_out, L)
      xs : (kt*c_in, L)      VMEM scratch for the K-stacked input (kt > 1)
    """
    i = 1
    xm_ref = refs[0]
    if has_halo:
        xh_ref = refs[1]
        i = 2
    w_ref, b_ref, o_ref = refs[i], refs[i + 1], refs[i + 2]
    xs_ref = refs[i + 3] if has_stack else None

    L = out_lanes
    if has_stack:
        # In-VMEM K-stacked unfold: row group dt holds window lanes [dt*N, dt*N + L).
        # Halo lanes go straight into the tail of the group (no concat copy).
        for dt in range(kt):
            r0, s = dt * c_in, dt * n_nodes
            if has_halo and s > 0:
                xs_ref[r0:r0 + c_in, :L - s] = xm_ref[:, s:]
                xs_ref[r0:r0 + c_in, L - s:] = xh_ref[:, :s]
            else:
                xs_ref[r0:r0 + c_in, :] = xm_ref[:, s:s + L]
        stacked = xs_ref[...]
    else:  # kt == 1: the main block already is the stacked input
        stacked = xm_ref[:, :L]

    # Single MXU matmul over the stacked contraction K = kt*c_in, f32 accumulation.
    acc = jnp.dot(w_ref[...], stacked, preferred_element_type=jnp.float32)
    acc = acc + b_ref[...]

    conv_p = acc[:c_out]                       # align/residual already folded in
    if act == 'GLU':
        out = conv_p * jax.nn.sigmoid(acc[gate_off:gate_off + c_out])
    elif act == 'sigmoid':
        out = jax.nn.sigmoid(conv_p)
    else:  # 'relu' (module default)
        out = jnp.maximum(conv_p, 0.0)

    o_ref[...] = out.astype(o_ref.dtype)


def temporal_conv_layer(x, params, *, kt, c_in, c_out, act='relu',
                        block_time=None, out_dtype=None):
    """Pallas forward of STGCN temporal_conv_layer.  x: (B, C_in, T, N)."""
    B, C, T, N = x.shape
    assert C == c_in and T >= kt
    Tp = T - kt + 1
    glu = (act == 'GLU')
    c_out2 = 2 * c_out if glu else c_out
    cdt = x.dtype                                  # MXU input dtype (bf16 ok)
    odt = jnp.dtype(cdt if out_dtype is None else out_dtype)
    ib = jnp.dtype(cdt).itemsize
    ob = odt.itemsize

    # Row layout: [conv(+align) rows | pad to 8 | gate rows] so the GLU gate slice
    # starts on a sublane boundary even when c_out % 8 != 0.
    gate_off = _round_up(c_out, 8) if glu else c_out
    c_rows = gate_off + c_out if glu else c_out
    K = kt * c_in

    # ---- fold align (1x1 conv / channel pad / identity) into the dt = kt-1 taps ----
    wc = jnp.asarray(params['w_conv'], jnp.float32).reshape(c_out2, c_in, kt)
    w_t = jnp.transpose(wc, (2, 0, 1))                         # (kt, c_out2, c_in)
    w_t = w_t.at[kt - 1, :c_out, :].add(jnp.asarray(params['w_align'], jnp.float32))
    b_conv = jnp.asarray(params['b_conv'], jnp.float32)
    b_p = b_conv[:c_out] + jnp.asarray(params['b_align'], jnp.float32)
    if glu:
        w_rows = jnp.zeros((kt, c_rows, c_in), jnp.float32)
        w_rows = w_rows.at[:, :c_out, :].set(w_t[:, :c_out, :])
        w_rows = w_rows.at[:, gate_off:, :].set(w_t[:, c_out:, :])
        b_rows = jnp.zeros((c_rows,), jnp.float32)
        b_rows = b_rows.at[:c_out].set(b_p).at[gate_off:].set(b_conv[c_out:])
    else:
        w_rows, b_rows = w_t, b_p
    # Column block dt of w_stack = w_rows[dt]  (matches the K-stacked scratch layout).
    w_stack = jnp.transpose(w_rows, (1, 0, 2)).reshape(c_rows, K).astype(cdt)
    b_stack = b_rows.reshape(c_rows, 1)                         # keep f32

    x3 = x.reshape(B, c_in, T * N)     # free reshape: lanes = flattened (time, node)

    # ---- generation-aware VMEM budget (v7x has 64 MiB physical, v5e/v6e 128 MiB) ----
    try:
        cap = int(pltpu.get_tpu_info().vmem_capacity_bytes)
    except Exception:
        cap = 128 * 1024 * 1024
    vmem_limit = int(min(max(cap // 2, 16 << 20), 64 << 20))
    budget = int(vmem_limit * 0.65)

    # ---- pick the time tile; Tt*N must be a multiple of 128 lanes (or use full blocks) ----
    t_gran = 128 // math.gcd(N, 128)
    if block_time is not None:
        Tt = max(t_gran, _round_up(int(block_time), t_gran))
    else:
        per_lane = (2 * c_in * ib              # double-buffered input block
                    + kt * c_in * ib           # K-stacked VMEM scratch
                    + (c_rows + c_out) * 4     # f32 matmul result + epilogue temps
                    + 2 * c_out * ob)          # double-buffered output block
        max_lanes = max(t_gran * N, budget // per_lane)
        target = min(64 * 1024, max_lanes)     # big lane-dense tiles (HBM-roofline)
        Tt = max(t_gran, (target // (t_gran * N)) * t_gran)
    # Guarantee >=2 grid steps when B == 1 so both v7x TensorCores get work.
    if B == 1 and Tt >= Tp and Tp >= 2 * t_gran:
        half = _round_up(-(-Tp // 2), t_gran)
        if half < Tp:
            Tt = half
    Tt = max(Tt, _round_up(kt, t_gran))        # window must cover the taps
    tiled = Tt < Tp

    if tiled:
        nt = -(-Tp // Tt)
        L = Tt * N
        has_halo = kt > 1
        inputs = [x3]
        in_specs = [pl.BlockSpec((None, c_in, L), lambda b, i: (b, 0, i))]
        if has_halo:
            hn = (kt - 1) * N
            # Tiny gathered side input (~(kt-1)/Tt extra traffic): each tile's kt-1
            # right-neighbour time rows, written straight into the K-stack tail.
            t_idx = jnp.clip((jnp.arange(nt)[:, None] + 1) * Tt
                             + jnp.arange(kt - 1)[None, :], 0, T - 1)
            xh = jnp.take(x, t_idx, axis=2)                    # (B, C_in, nt, kt-1, N)
            xh = jnp.transpose(xh, (0, 2, 1, 3, 4)).reshape(B, nt, c_in, hn)
            inputs.append(xh)
            in_specs.append(pl.BlockSpec((None, None, c_in, hn), lambda b, i: (b, i, 0, 0)))
        out_spec = pl.BlockSpec((None, c_out, L), lambda b, i: (b, 0, i))
    else:
        # Small problem: one full-extent block per batch element.
        nt = 1
        L = Tp * N
        has_halo = False
        inputs = [x3]
        in_specs = [pl.BlockSpec((None, c_in, T * N), lambda b, i: (b, 0, 0))]
        out_spec = pl.BlockSpec((None, c_out, L), lambda b, i: (b, 0, 0))

    inputs += [w_stack, b_stack]
    in_specs += [pl.BlockSpec((c_rows, K), lambda b, i: (0, 0)),
                 pl.BlockSpec((c_rows, 1), lambda b, i: (0, 0))]

    has_stack = kt > 1
    scratch_shapes = [pltpu.VMEM((K, L), cdt)] if has_stack else []

    kernel = functools.partial(
        _tconv_kernel, kt=kt, c_in=c_in, c_out=c_out, gate_off=gate_off,
        n_nodes=N, out_lanes=L, act=act, has_halo=has_halo, has_stack=has_stack)

    # TODO(synk): if DMA is still exposed on v7x after the larger tiles, bump the main
    # input spec to pipeline_mode=pl.Buffered(3).
    out = pl.pallas_call(
        kernel,
        out_shape=jax.ShapeDtypeStruct((B, c_out, Tp * N), odt),
        grid_spec=pltpu.PrefetchScalarGridSpec(
            num_scalar_prefetch=0,
            grid=(B, nt),
            in_specs=in_specs,
            out_specs=out_spec,
            scratch_shapes=scratch_shapes),
        compiler_params=pltpu.CompilerParams(
            dimension_semantics=("parallel", "parallel"),
            vmem_limit_bytes=vmem_limit),
    )(*inputs)

    return out.reshape(B, c_out, Tp, N)


def init_params(key, kt, c_in, c_out, act):
    """Deterministic synthetic parameters matching the PyTorch module shapes."""
    c_out2 = 2 * c_out if act == 'GLU' else c_out
    k1, k2, k3, k4 = jax.random.split(key, 4)
    w_conv = 0.1 * jax.random.normal(k1, (c_out2, c_in, kt, 1), jnp.float32)
    b_conv = 0.1 * jax.random.normal(k2, (c_out2,), jnp.float32)
    if c_in > c_out:
        # align = nn.Conv2d(c_in, c_out, 1)
        w_align = 0.1 * jax.random.normal(k3, (c_out, c_in), jnp.float32)
        b_align = 0.1 * jax.random.normal(k4, (c_out,), jnp.float32)
    elif c_in < c_out:
        # align = zero-pad channels -> [I; 0] matrix, zero bias
        w_align = jnp.concatenate(
            [jnp.eye(c_in, dtype=jnp.float32),
             jnp.zeros((c_out - c_in, c_in), jnp.float32)], axis=0)
        b_align = jnp.zeros((c_out,), jnp.float32)
    else:
        w_align = jnp.eye(c_in, dtype=jnp.float32)
        b_align = jnp.zeros((c_out,), jnp.float32)
    return dict(w_conv=w_conv, b_conv=b_conv, w_align=w_align, b_align=b_align)


def ref_forward(x, params, kt, c_in, c_out, act):
    """Pure-JAX reference matching the PyTorch forward semantics (f32)."""
    conv = lax.conv_general_dilated(
        x, params['w_conv'], window_strides=(1, 1), padding='VALID',
        dimension_numbers=('NCHW', 'OIHW', 'NCHW'))
    conv = conv + params['b_conv'][None, :, None, None]
    x_al = jnp.einsum('oc,bctn->botn', params['w_align'], x)
    x_al = x_al + params['b_align'][None, :, None, None]
    x_in = x_al[:, :, kt - 1:, :]
    if act == 'GLU':
        return (conv[:, :c_out] + x_in) * jax.nn.sigmoid(conv[:, c_out:])
    if act == 'sigmoid':
        return jax.nn.sigmoid(conv + x_in)
    return jnp.maximum(conv + x_in, 0.0)


if __name__ == "__main__":
    root = jax.random.PRNGKey(0)

    configs = [
        # name,             B, ci, co, T,  N, kt, act,       dtype,        block_time, tol
        ("GLU/tiled",       2, 4,  8, 16, 16, 3, 'GLU',     jnp.float32,   8,          1e-5),
        ("relu/fullblock",  2, 8,  4, 16, 16, 3, 'relu',    jnp.bfloat16,  None,       5e-2),
        ("sigmoid/ragged",  1, 6,  6, 12, 32, 2, 'sigmoid', jnp.float32,   4,          1e-5),
        ("relu/autosplit",  1, 4,  4, 40, 16, 3, 'relu',    jnp.float32,   None,       1e-5),
    ]
    for name, B, ci, co, T, N, kt, act, dtype, bt, tol in configs:
        kx, kp, root = jax.random.split(root, 3)
        x = jax.random.normal(kx, (B, ci, T, N), jnp.float32)
        params = init_params(kp, kt, ci, co, act)
        xin = x.astype(dtype)
        out = jax.block_until_ready(
            temporal_conv_layer(xin, params, kt=kt, c_in=ci, c_out=co, act=act,
                                block_time=bt))
        ref = ref_forward(xin.astype(jnp.float32), params, kt, ci, co, act)
        assert out.shape == (B, co, T - kt + 1, N), name
        outf = out.astype(jnp.float32)
        err = float(jnp.max(jnp.abs(outf - ref)))
        assert jnp.allclose(outf, ref, atol=tol, rtol=tol), f"{name} mismatch (max err {err})"

    print("KERNEL_OK")
</pallas_src>

<mosaic_0001>
module attributes {stable_mosaic.version = 11 : i64} {
  func.func @_tconv_kernel(%arg0: i32, %arg1: i32, %arg2: memref<1x4x128xf32, #tpu.memory_space<vmem>>, %arg3: memref<1x1x4x32xf32, #tpu.memory_space<vmem>>, %arg4: memref<16x12xf32, #tpu.memory_space<vmem>>, %arg5: memref<16x1xf32, #tpu.memory_space<vmem>>, %arg6: memref<1x8x128xf32, #tpu.memory_space<vmem>>, %arg7: memref<12x128xf32, #tpu.memory_space<vmem>>) attributes {dimension_semantics = [#tpu.dimension_semantics<parallel>, #tpu.dimension_semantics<parallel>], iteration_bounds = array<i64: 2, 2>, scalar_prefetch = 0 : i64, scratch_operands = 1 : i64, tpu.core_type = #tpu.core_type<tc>, window_params = [{transform_indices = @transform_0, window_bounds = array<i64: 1, 4, 128>}, {transform_indices = @transform_1, window_bounds = array<i64: 1, 1, 4, 32>}, {pipeline_mode = #tpu.pipeline_mode<synchronous>, transform_indices = @transform_2, window_bounds = array<i64: 16, 12>}, {pipeline_mode = #tpu.pipeline_mode<synchronous>, transform_indices = @transform_3, window_bounds = array<i64: 16, 1>}, {transform_indices = @transform_4, window_bounds = array<i64: 1, 8, 128>}]} {
    %c0 = arith.constant 0 : index
    %c0_0 = arith.constant 0 : index
    %c0_1 = arith.constant 0 : index
    %0 = vector.load %arg2[%c0, %c0_0, %c0_1] : memref<1x4x128xf32, #tpu.memory_space<vmem>>, vector<1x4x128xf32>
    %1 = vector.shape_cast %0 : vector<1x4x128xf32> to vector<4x128xf32>
    %c0_2 = arith.constant 0 : index
    %c0_3 = arith.constant 0 : index
    %2 = vector.load %arg7[%c0_2, %c0_3] : memref<12x128xf32, #tpu.memory_space<vmem>>, vector<4x128xf32>
    tpu.vector_store %arg7[%c0_2, %c0_3], %1 {strides = array<i32>} : memref<12x128xf32, #tpu.memory_space<vmem>>, vector<4x128xf32>,
    %c0_4 = arith.constant 0 : index
    %c0_5 = arith.constant 0 : index
    %c16 = arith.constant 16 : index
    %3 = vector.load %arg2[%c0_4, %c0_5, %c16] : memref<1x4x128xf32, #tpu.memory_space<vmem>>, vector<1x4x112xf32>
    %4 = vector.shape_cast %3 : vector<1x4x112xf32> to vector<4x112xf32>
    %c4 = arith.constant 4 : index
    %c0_6 = arith.constant 0 : index
    %5 = vector.load %arg7[%c4, %c0_6] : memref<12x128xf32, #tpu.memory_space<vmem>>, vector<4x112xf32>
    tpu.vector_store %arg7[%c4, %c0_6], %4 {strides = array<i32>} : memref<12x128xf32, #tpu.memory_space<vmem>>, vector<4x112xf32>,
    %c0_7 = arith.constant 0 : index
    %c0_8 = arith.constant 0 : index
    %c0_9 = arith.constant 0 : index
    %c0_10 = arith.constant 0 : index
    %6 = vector.load %arg3[%c0_7, %c0_8, %c0_9, %c0_10] : memref<1x1x4x32xf32, #tpu.memory_space<vmem>>, vector<1x1x4x16xf32>
    %7 = vector.shape_cast %6 : vector<1x1x4x16xf32> to vector<4x16xf32>
    %c4_11 = arith.constant 4 : index
    %c112 = arith.constant 112 : index
    %8 = vector.load %arg7[%c4_11, %c112] : memref<12x128xf32, #tpu.memory_space<vmem>>, vector<4x16xf32>
    tpu.vector_store %arg7[%c4_11, %c112], %7 {strides = array<i32>} : memref<12x128xf32, #tpu.memory_space<vmem>>, vector<4x16xf32>,
    %c0_12 = arith.constant 0 : index
    %c0_13 = arith.constant 0 : index
    %c32 = arith.constant 32 : index
    %9 = vector.load %arg2[%c0_12, %c0_13, %c32] : memref<1x4x128xf32, #tpu.memory_space<vmem>>, vector<1x4x96xf32>
    %10 = vector.shape_cast %9 : vector<1x4x96xf32> to vector<4x96xf32>
    %c8 = arith.constant 8 : index
    %c0_14 = arith.constant 0 : index
    %11 = vector.load %arg7[%c8, %c0_14] : memref<12x128xf32, #tpu.memory_space<vmem>>, vector<4x96xf32>
    tpu.vector_store %arg7[%c8, %c0_14], %10 {strides = array<i32>} : memref<12x128xf32, #tpu.memory_space<vmem>>, vector<4x96xf32>,
    %c0_15 = arith.constant 0 : index
    %c0_16 = arith.constant 0 : index
    %c0_17 = arith.constant 0 : index
    %c0_18 = arith.constant 0 : index
    %12 = vector.load %arg3[%c0_15, %c0_16, %c0_17, %c0_18] : memref<1x1x4x32xf32, #tpu.memory_space<vmem>>, vector<1x1x4x32xf32>
    %13 = vector.shape_cast %12 : vector<1x1x4x32xf32> to vector<4x32xf32>
    %c8_19 = arith.constant 8 : index
    %c96 = arith.constant 96 : index
    %14 = vector.load %arg7[%c8_19, %c96] : memref<12x128xf32, #tpu.memory_space<vmem>>, vector<4x32xf32>
    tpu.vector_store %arg7[%c8_19, %c96], %13 {strides = array<i32>} : memref<12x128xf32, #tpu.memory_space<vmem>>, vector<4x32xf32>,
    %c0_20 = arith.constant 0 : index
    %c0_21 = arith.constant 0 : index
    %15 = vector.load %arg7[%c0_20, %c0_21] : memref<12x128xf32, #tpu.memory_space<vmem>>, vector<12x128xf32>
    %c0_22 = arith.constant 0 : index
    %c0_23 = arith.constant 0 : index
    %16 = vector.load %arg4[%c0_22, %c0_23] : memref<16x12xf32, #tpu.memory_space<vmem>>, vector<16x12xf32>
    %cst = arith.constant dense<0.000000e+00> : vector<16x128xf32>
    %17 = tpu.matmul %16, %15, %cst {dimension_numbers = #tpu.dot_dimension_numbers<[1], [0], [0], [1], [0, 0, 1, 1], [], []>} : vector<16x12xf32>, vector<12x128xf32>, vector<16x128xf32> -> vector<16x128xf32>
    %c0_24 = arith.constant 0 : index
    %c0_25 = arith.constant 0 : index
    %18 = vector.load %arg5[%c0_24, %c0_25] : memref<16x1xf32, #tpu.memory_space<vmem>>, vector<16x1xf32>
    %19 = vector.broadcast %18 : vector<16x1xf32> to vector<16x128xf32>
    %20 = arith.addf %17, %19 : vector<16x128xf32>
    %21 = vector.extract_strided_slice %20 {offsets = [0, 0], sizes = [8, 128], strides = [1, 1]} : vector<16x128xf32> to vector<8x128xf32>
    %22 = vector.extract_strided_slice %20 {offsets = [8, 0], sizes = [8, 128], strides = [1, 1]} : vector<16x128xf32> to vector<8x128xf32>
    %23 = arith.negf %22 : vector<8x128xf32>
    %24 = math.exp %23 : vector<8x128xf32>
    %cst_26 = arith.constant 1.000000e+00 : f32
    %25 = vector.broadcast %cst_26 : f32 to vector<8x128xf32>
    %26 = arith.addf %25, %24 : vector<8x128xf32>
    %27 = arith.divf %25, %26 : vector<8x128xf32>
    %28 = arith.mulf %21, %27 : vector<8x128xf32>
    %c0_27 = arith.constant 0 : index
    %c0_28 = arith.constant 0 : index
    %c0_29 = arith.constant 0 : index
    %29 = vector.load %arg6[%c0_27, %c0_28, %c0_29] : memref<1x8x128xf32, #tpu.memory_space<vmem>>, vector<1x8x128xf32>
    %30 = vector.shape_cast %29 : vector<1x8x128xf32> to vector<8x128xf32>
    %31 = vector.shape_cast %28 : vector<8x128xf32> to vector<1x8x128xf32>
    tpu.vector_store %arg6[%c0_27, %c0_28, %c0_29], %31 {strides = array<i32>} : memref<1x8x128xf32, #tpu.memory_space<vmem>>, vector<1x8x128xf32>,
    return
  }
  func.func @transform_0(%arg0: i32, %arg1: i32) -> (i32, i32, i32) {
    %c0_i32 = arith.constant 0 : i32
    %c0_i32_0 = arith.constant 0 : i32
    return %arg0, %c0_i32, %arg1 : i32, i32, i32
  }
  func.func @transform_1(%arg0: i32, %arg1: i32) -> (i32, i32, i32, i32) {
    %c0_i32 = arith.constant 0 : i32
    %c0_i32_0 = arith.constant 0 : i32
    %c0_i32_1 = arith.constant 0 : i32
    return %arg0, %arg1, %c0_i32, %c0_i32_0 : i32, i32, i32, i32
  }
  func.func @transform_2(%arg0: i32, %arg1: i32) -> (i32, i32) {
    %c0_i32 = arith.constant 0 : i32
    %c0_i32_0 = arith.constant 0 : i32
    %c0_i32_1 = arith.constant 0 : i32
    return %c0_i32, %c0_i32_0 : i32, i32
  }
  func.func @transform_3(%arg0: i32, %arg1: i32) -> (i32, i32) {
    %c0_i32 = arith.constant 0 : i32
    %c0_i32_0 = arith.constant 0 : i32
    %c0_i32_1 = arith.constant 0 : i32
    return %c0_i32, %c0_i32_0 : i32, i32
  }
  func.func @transform_4(%arg0: i32, %arg1: i32) -> (i32, i32, i32) {
    %c0_i32 = arith.constant 0 : i32
    %c0_i32_0 = arith.constant 0 : i32
    return %arg0, %c0_i32, %arg1 : i32, i32, i32
  }
}

</mosaic_0001>

<llo_original>
// kernel: tpu_custom_call.1
$region0: #{tpu_custom_call.1}
  #allocation0 [shape = 'u32[]', space=smem, size = 0x4, offset = 0x4, fixed_abs, tag = 'smem constant byte address 0x4 - core index']
  #allocation1 [shape = 'u32[144,128]{1,0:T(1,128)}', space=vmem, size = 0x12000, scoped, tag = 'internal scratch']
  #allocation2 [shape = 'f32[12,128]{1,0:T(8,128)}', space=vmem, size = 0x2000, scoped, tag = 'scratch operand']
  %s0 = inlined_call_operand.hbm [shape: f32[2,4,256], index: 0, kind: input, shape index: {}]
  %s1 = inlined_call_operand.hbm [shape: f32[2,2,4,32], index: 1, kind: input, shape index: {}]
  %s2 = inlined_call_operand.hbm [shape: f32[16,12], index: 2, kind: input, shape index: {}]
  %s3 = inlined_call_operand.hbm [shape: f32[16,1], index: 3, kind: input, shape index: {}]
  %s4 = inlined_call_operand.hbm [shape: f32[2,8,224], index: 4, kind: output, shape index: {}]
  %s5 = sld [smem:[#allocation0]]
  $region65: #{tpu_custom_call.1} parent=0
    _
  %s7 = ssub.s32 1, %s5
  %s8 = scalar_select 0, %s7, %s5
  $region1: #{tpu_custom_call.1} parent=0
    #allocation3 [shape = 'u8[4096]{0}', space=vmem, size = 0x1000, scoped, tag = 'input window, operand 0']
    #allocation4 [shape = 's32[2]{0}', space=sflag, size = 0x8, scoped, tag = 'scoped memory for tpu_custom_call.1']
    #allocation5 [shape = 's32[2]{0}', space=sflag, size = 0x8, scoped, tag = 'scoped memory for tpu_custom_call.1']
    #allocation6 [shape = 'u8[4096]{0}', space=vmem, size = 0x1000, scoped, tag = 'input window, operand 1']
    #allocation7 [shape = 's32[2]{0}', space=sflag, size = 0x8, scoped, tag = 'scoped memory for tpu_custom_call.1']
    #allocation8 [shape = 'u8[8192]{0}', space=vmem, size = 0x2000, scoped, tag = 'input window, operand 2, single buffered']
    #allocation9 [shape = 'u8[8192]{0}', space=vmem, size = 0x2000, scoped, tag = 'input window, operand 3, single buffered']
    #allocation10 [shape = 's32[1]{0}', space=sflag, size = 0x4, scoped, tag = 'scoped memory for tpu_custom_call.1']
    #allocation11 [shape = 'u8[8192]{0}', space=vmem, size = 0x2000, scoped, tag = 'output window, operand 0']
    %9 = vsyncpa [#allocation4], 0
    %s10 = scalar_lea.sflag [#allocation4], 1
    %11 = vsyncpa %s10, 0
    %12 = vsyncpa [#allocation7], 0
    %s13 = scalar_lea.sflag [#allocation7], 1
    %14 = vsyncpa %s13, 0
    %15 = vsyncpa [#allocation10], 0
    %16 = vsyncpa [#allocation5], 0
    %s17 = scalar_lea.sflag [#allocation5], 1
    %18 = vsyncpa %s17, 0
    loop: start=0, step=1, limit=6
    $region2: #{tpu_custom_call.1} parent=1 // loop_pre_header
      _
    $region3: #{tpu_custom_call.1} parent=1 // loop_header
      %s20 = sphi 0, %s24
      %p21 = scmp.ge.s32.totalorder %s20, 6
      %s27 = sphi 0, %s39
      %s28 = sphi 0, %s35
      %s29 = sphi 0, %s27
      %s30 = sphi 0, %s28
      %s31 = sphi 0, %s29
      %s32 = sphi 0, %s30
      %s44 = sphi 0, %s46
      %s47 = sphi 0, %s44
      %s48 = sphi 0, %s47
      %s64 = sphi 0, %s48
      %s72 = sphi 0, %s74
      %s75 = sphi 0, %s72
      %s76 = sphi 0, %s75
      %s92 = sphi 0, %s76
      %s96 = sphi 0, %s96
      %s98 = sphi 0, %s96
      %s99 = sphi 0, %s98
      %s113 = sphi 0, %s99
      %s117 = sphi 0, %s117
      %s119 = sphi 0, %s117
      %s120 = sphi 0, %s119
      %s134 = sphi 0, %s120
      %s142 = sphi 0, %s144
      %s145 = sphi 0, %s142
      %s146 = sphi 0, %s145
      %s162 = sphi 0, %s146
    $region4: #{tpu_custom_call.1} parent=1 // loop_header_branch
      %23 = sbr.rel (%p21) target = $region8
    $region5: #{tpu_custom_call.1} parent=1 // loop_body
      %s25 = ssub.s32 %s20, 1
      %s26 = ssub.s32 %s20, 2
      %s33 = sadd.s32 1, %s28
      %p34 = scmp.ge.s32.totalorder %s33, 2
      %s35 = scalar_select %p34, 0, %s33
      %s36 = sadd.s32 1, %s27
      %s37 = scalar_select %p34, %s36, %s27
      %p38 = scmp.ge.s32.totalorder %s37, 2
      %s39 = scalar_select %p38, 0, %s37
      %s40 = ssub.s32 %s27, %s39
      %s41 = ssub.s32 %s28, %s35
      %s42 = sor.u32 %s40, %s41
      %p43 = scmp.eq.s32.totalorder %s42, 0
      %s45 = sadd.s32 %s44, 1
      %s46 = scalar_select %p43, %s44, %s45
      %p49 = pneg %p43
      %p50 = scmp.eq.s32.totalorder %s20, 3
      %p51 = por %p49, %p50
      %p52 = scmp.ne.s32.totalorder %s44, %s47
      %p53 = scmp.eq.s32.totalorder %s20, 0
      %p54 = por %p52, %p53
      %p55 = scmp.ne.s32.totalorder %s44, %s47
      %p56 = scmp.eq.s32.totalorder %s25, 3
      %p57 = por %p55, %p56
      %p58 = scmp.ne.s32.totalorder %s47, %s48
      %p59 = scmp.eq.s32.totalorder %s25, 0
      %p60 = por %p58, %p59
      %p61 = scmp.ne.s32.totalorder %s47, %s48
      %p62 = scmp.eq.s32.totalorder %s26, 3
      %p63 = por %p61, %p62
      %p65 = scmp.ne.s32.totalorder %s48, %s64
      %p66 = scmp.eq.s32.totalorder %s26, 0
      %p67 = por %p65, %p66
      %s68 = ssub.s32 %s27, %s39
      %s69 = ssub.s32 %s28, %s35
      %s70 = sor.u32 %s68, %s69
      %p71 = scmp.eq.s32.totalorder %s70, 0
      %s73 = sadd.s32 %s72, 1
      %s74 = scalar_select %p71, %s72, %s73
      %p77 = pneg %p71
      %p78 = scmp.eq.s32.totalorder %s20, 3
      %p79 = por %p77, %p78
      %p80 = scmp.ne.s32.totalorder %s72, %s75
      %p81 = scmp.eq.s32.totalorder %s20, 0
      %p82 = por %p80, %p81
      %p83 = scmp.ne.s32.totalorder %s72, %s75
      %p84 = scmp.eq.s32.totalorder %s25, 3
      %p85 = por %p83, %p84
      %p86 = scmp.ne.s32.totalorder %s75, %s76
      %p87 = scmp.eq.s32.totalorder %s25, 0
      %p88 = por %p86, %p87
      %p89 = scmp.ne.s32.totalorder %s75, %s76
      %p90 = scmp.eq.s32.totalorder %s26, 3
      %p91 = por %p89, %p90
      %p93 = scmp.ne.s32.totalorder %s76, %s92
      %p94 = scmp.eq.s32.totalorder %s26, 0
      %p95 = por %p93, %p94
      %s97 = sadd.s32 %s96, 1
      %p100 = scmp.eq.s32.totalorder %s20, 3
      %p101 = scmp.ne.s32.totalorder %s96, %s98
      %p102 = scmp.eq.s32.totalorder %s20, 0
      %p103 = por %p101, %p102
      %p104 = scmp.ne.s32.totalorder %s96, %s98
      %p105 = scmp.eq.s32.totalorder %s25, 3
      %p106 = por %p104, %p105
      %p107 = scmp.ne.s32.totalorder %s98, %s99
      %p108 = scmp.eq.s32.totalorder %s25, 0
      %p109 = por %p107, %p108
      %p110 = scmp.ne.s32.totalorder %s98, %s99
      %p111 = scmp.eq.s32.totalorder %s26, 3
      %p112 = por %p110, %p111
      %p114 = scmp.ne.s32.totalorder %s99, %s113
      %p115 = scmp.eq.s32.totalorder %s26, 0
      %p116 = por %p114, %p115
      %s118 = sadd.s32 %s117, 1
      %p121 = scmp.eq.s32.totalorder %s20, 3
      %p122 = scmp.ne.s32.totalorder %s117, %s119
      %p123 = scmp.eq.s32.totalorder %s20, 0
      %p124 = por %p122, %p123
      %p125 = scmp.ne.s32.totalorder %s117, %s119
      %p126 = scmp.eq.s32.totalorder %s25, 3
      %p127 = por %p125, %p126
      %p128 = scmp.ne.s32.totalorder %s119, %s120
      %p129 = scmp.eq.s32.totalorder %s25, 0
      %p130 = por %p128, %p129
      %p131 = scmp.ne.s32.totalorder %s119, %s120
      %p132 = scmp.eq.s32.totalorder %s26, 3
      %p133 = por %p131, %p132
      %p135 = scmp.ne.s32.totalorder %s120, %s134
      %p136 = scmp.eq.s32.totalorder %s26, 0
      %p137 = por %p135, %p136
      %s138 = ssub.s32 %s27, %s39
      %s139 = ssub.s32 %s28, %s35
      %s140 = sor.u32 %s138, %s139
      %p141 = scmp.eq.s32.totalorder %s140, 0
      %s143 = sadd.s32 %s142, 1
      %s144 = scalar_select %p141, %s142, %s143
      %p147 = pneg %p141
      %p148 = scmp.eq.s32.totalorder %s20, 3
      %p149 = por %p147, %p148
      %p150 = scmp.ne.s32.totalorder %s142, %s145
      %p151 = scmp.eq.s32.totalorder %s20, 0
      %p152 = por %p150, %p151
      %p153 = scmp.ne.s32.totalorder %s142, %s145
      %p154 = scmp.eq.s32.totalorder %s25, 3
      %p155 = por %p153, %p154
      %p156 = scmp.ne.s32.totalorder %s145, %s146
      %p157 = scmp.eq.s32.totalorder %s25, 0
      %p158 = por %p156, %p157
      %p159 = scmp.ne.s32.totalorder %s145, %s146
      %p160 = scmp.eq.s32.totalorder %s26, 3
      %p161 = por %p159, %p160
      %p163 = scmp.ne.s32.totalorder %s146, %s162
      %p164 = scmp.eq.s32.totalorder %s26, 0
      %p165 = por %p163, %p164
      %p166 = scmp.le.s32.totalorder 1, %s20
      %p167 = scmp.lt.s32.totalorder %s20, 5
      %p168 = pnand %p166, %p167
      %p169 = pneg %p168
      // Predicated region
      $region9: #{tpu_custom_call.1} parent=5 // pred_check
        _
      $region10: #{tpu_custom_call.1} parent=5 // pred_check_branch
        %171 = sbr.rel (%p168) target = $region12
      $region11: #{tpu_custom_call.1} parent=5 // pred_region
        %s172 = ssub.s32 %s20, 1
        // Predicated region
        $region13: #{tpu_custom_call.1} parent=11 // pred_check
          %p173 = pneg %p109
        $region14: #{tpu_custom_call.1} parent=11 // pred_check_branch
          %175 = sbr.rel (%p173) target = $region16
        $region15: #{tpu_custom_call.1} parent=11 // pred_region
          %s177 = ssub.s32 256, 256
          %178 = vsyncadd [#allocation7], %s177
          %s179 = sshll.u32 [#allocation8], 4
          %s180 = int_to_ptr.vmem [resolvable:$true] %s179
          %185 = dma.hbm_to_vmem [thread:$0]  %s2, 256, %s180, [#allocation7], 128, 128, 8
        $region16: #{tpu_custom_call.1} parent=11 // pred_fallthru
          _
        // Predicated region
        $region17: #{tpu_custom_call.1} parent=11 // pred_check
          %p186 = pneg %p130
        $region18: #{tpu_custom_call.1} parent=11 // pred_check_branch
          %188 = sbr.rel (%p186) target = $region20
        $region19: #{tpu_custom_call.1} parent=11 // pred_region
          %s190 = ssub.s32 256, 256
          %191 = vsyncadd [#allocation10], %s190
          %s192 = sshll.u32 [#allocation9], 4
          %s193 = int_to_ptr.vmem [resolvable:$true] %s192
          %198 = dma.hbm_to_vmem [thread:$0]  %s3, 256, %s193, [#allocation10], 128, 128, 8
        $region20: #{tpu_custom_call.1} parent=11 // pred_fallthru
          _
      $region12: #{tpu_custom_call.1} parent=5 // pred_fallthru
        _
      %p199 = scmp.lt.s32.totalorder %s20, 4
      // Predicated region
      $region21: #{tpu_custom_call.1} parent=5 // pred_check
        %p200 = pneg %p199
      $region22: #{tpu_custom_call.1} parent=5 // pred_check_branch
        %202 = sbr.rel (%p200) target = $region24
      $region23: #{tpu_custom_call.1} parent=5 // pred_region
        // Predicated region
        $region25: #{tpu_custom_call.1} parent=23 // pred_check
          %p203 = pneg %p54
        $region26: #{tpu_custom_call.1} parent=23 // pred_check_branch
          %205 = sbr.rel (%p203) target = $region28
        $region27: #{tpu_custom_call.1} parent=23 // pred_region
          %s206 = sand.u32 %s44, 1
          %s207 = scalar_lea.sflag [#allocation4], %s206
          %s208 = sand.u32 %s44, 1
          %s209 = smul.addr %s208, 4
          %s210 = scalar_lea.vmem [#allocation3], %s209
          %s212 = ssub.s32 64, 64
          %213 = vsyncadd %s207, %s212
          %s214 = smul.addr %s27, 2
          %s215 = sadd.s32 %s28, %s214
          %s216 = smul.addr %s215, 64
          %s217 = scalar_lea.hbm %s0, %s216
          %s219 = sshll.u32 %s210, 4
          %s220 = int_to_ptr.vmem [resolvable:$true] %s219
          %222 = dma.hbm_to_vmem [thread:$0]  %s217, 64, %s220, %s207
        $region28: #{tpu_custom_call.1} parent=23 // pred_fallthru
          _
        // Predicated region
        $region29: #{tpu_custom_call.1} parent=23 // pred_check
          %p223 = pneg %p82
        $region30: #{tpu_custom_call.1} parent=23 // pred_check_branch
          %225 = sbr.rel (%p223) target = $region32
        $region31: #{tpu_custom_call.1} parent=23 // pred_region
          %s226 = sand.u32 %s20, 1
          %s227 = scalar_lea.sflag [#allocation7], %s226
          %s228 = sand.u32 %s72, 1
          %s229 = smul.addr %s228, 4
          %s230 = scalar_lea.vmem [#allocation6], %s229
          %s232 = ssub.s32 64, 64
          %233 = vsyncadd %s227, %s232
          %s234 = smul.addr %s27, 2
          %s235 = sadd.s32 %s28, %s234
          %s236 = smul.addr %s235, 64
          %s237 = scalar_lea.hbm %s1, %s236
          %s239 = sshll.u32 %s230, 4
          %s240 = int_to_ptr.vmem [resolvable:$true] %s239
          %242 = dma.hbm_to_vmem [thread:$0]  %s237, 64, %s240, %s227
        $region32: #{tpu_custom_call.1} parent=23 // pred_fallthru
          _
      $region24: #{tpu_custom_call.1} parent=5 // pred_fallthru
        _
      %p243 = scmp.le.s32.totalorder 1, %s20
      %p244 = scmp.lt.s32.totalorder %s20, 5
      %p245 = pnand %p243, %p244
      %p246 = pneg %p245
      // Predicated region
      $region33: #{tpu_custom_call.1} parent=5 // pred_check
        _
      $region34: #{tpu_custom_call.1} parent=5 // pred_check_branch
        %248 = sbr.rel (%p245) target = $region36
      $region35: #{tpu_custom_call.1} parent=5 // pred_region
        %s249 = ssub.s32 %s20, 1
        %s250 = sand.u32 %s47, 1
        %s251 = scalar_lea.sflag [#allocation4], %s250
        %s252 = sand.u32 %s47, 1
        %s253 = smul.addr %s252, 4
        %s254 = scalar_lea.vmem [#allocation3], %s253
        // Predicated region
        $region37: #{tpu_custom_call.1} parent=35 // pred_check
          %p255 = pneg %p60
        $region38: #{tpu_custom_call.1} parent=35 // pred_check_branch
          %257 = sbr.rel (%p255) target = $region40
        $region39: #{tpu_custom_call.1} parent=35 // pred_region
          %258 = dma.done %s251, 64
        $region40: #{tpu_custom_call.1} parent=35 // pred_fallthru
          _
        %s259 = sand.u32 %s25, 1
        %s260 = scalar_lea.sflag [#allocation7], %s259
        %s261 = sand.u32 %s75, 1
        %s262 = smul.addr %s261, 4
        %s263 = scalar_lea.vmem [#allocation6], %s262
        // Predicated region
        $region41: #{tpu_custom_call.1} parent=35 // pred_check
          %p264 = pneg %p88
        $region42: #{tpu_custom_call.1} parent=35 // pred_check_branch
          %266 = sbr.rel (%p264) target = $region44
        $region43: #{tpu_custom_call.1} parent=35 // pred_region
          %267 = dma.done %s260, 64
        $region44: #{tpu_custom_call.1} parent=35 // pred_fallthru
          _
        // Predicated region
        $region45: #{tpu_custom_call.1} parent=35 // pred_check
          %p268 = pneg %p109
        $region46: #{tpu_custom_call.1} parent=35 // pred_check_branch
          %270 = sbr.rel (%p268) target = $region48
        $region47: #{tpu_custom_call.1} parent=35 // pred_region
          %271 = dma.done [#allocation7], 256
        $region48: #{tpu_custom_call.1} parent=35 // pred_fallthru
          _
        // Predicated region
        $region49: #{tpu_custom_call.1} parent=35 // pred_check
          %p272 = pneg %p130
        $region50: #{tpu_custom_call.1} parent=35 // pred_check_branch
          %274 = sbr.rel (%p272) target = $region52
        $region51: #{tpu_custom_call.1} parent=35 // pred_region
          %275 = dma.done [#allocation10], 256
        $region52: #{tpu_custom_call.1} parent=35 // pred_fallthru
          _
        %s276 = sand.u32 %s47, 1
        %s277 = scalar_lea.sflag [#allocation4], %s276
        %s278 = sand.u32 %s47, 1
        %s279 = smul.addr %s278, 4
        %s280 = scalar_lea.vmem [#allocation3], %s279
        %p281 = pneg %p60
        %p282 = pneg %p57
        %s283 = sand.u32 %s25, 1
        %s284 = scalar_lea.sflag [#allocation7], %s283
        %s285 = sand.u32 %s75, 1
        %s286 = smul.addr %s285, 4
        %s287 = scalar_lea.vmem [#allocation6], %s286
        %p288 = pneg %p88
        %p289 = pneg %p85
        %p290 = pneg %p109
        %p291 = pneg %p106
        %p292 = pneg %p130
        %p293 = pneg %p127
        %p294 = pneg %p158
        %p295 = pneg %p155
        %s296 = sand.u32 %s145, 1
        %s297 = scalar_lea.sflag [#allocation5], %s296
        %s298 = sand.u32 %s145, 1
        %s299 = smul.addr %s298, 8
        %s300 = scalar_lea.vmem [#allocation11], %s299
        %v301 = vld [vmem:[%s254] sm:$0xf]
        %302 = vst [vmem:[#allocation2] sm:$0xf] %v301
        %v303 = vld [vmem:[%s254] sm:$0xf]
        %305 = vrot.lane.b32.xlu0 %v303, 112
        %v306 = vpop.permute.xlu0 %305
        %vm308 = vcmask 912384
        %309 = vst.msk [vmem:[#allocation2 + $0x4] sm:$0xf] %vm308, %v306
        %v310 = vld [vmem:[%s263] sm:$0xf]
        %312 = vrot.lane.b32.xlu0 %v310, 112
        %v313 = vpop.permute.xlu0 %312
        %vm315 = vcmask 1044352
        %316 = vst.msk [vmem:[#allocation2 + $0x4] sm:$0xf] %vm315, %v313
        %v317 = vld [vmem:[%s254] sm:$0xf]
        %319 = vrot.lane.b32.xlu0 %v317, 96
        %v320 = vpop.permute.xlu0 %319
        %vm322 = vcmask 781312
        %323 = vst.msk [vmem:[#allocation2 + $0x8] sm:$0xf] %vm322, %v320
        %v324 = vld [vmem:[%s263] sm:$0xf]
        %326 = vrot.lane.b32.xlu0 %v324, 96
        %v327 = vpop.permute.xlu0 %326
        %vm329 = vcmask 1044224
        %330 = vst.msk [vmem:[#allocation2 + $0x8] sm:$0xf] %vm329, %v327
        %v331 = vld [vmem:[#allocation2] sm:$0xff]
        %v332 = vld [vmem:[#allocation2 + $0x8] sm:$0xf]
        %v333 = vld [vmem:[#allocation8] sm:$0xff]
        %v334 = vld [vmem:[#allocation8 + $0x8] sm:$0xff]
        %v335 = vld [vmem:[#allocation9] sm:$0xff]
        %v336 = vld [vmem:[#allocation9 + $0x8] sm:$0xff]
        %338 = vset.pattern.permute.xlu0 0
        %339 = vperm.xlu0 %338, %v335
        %v340 = vpop.permute.xlu0 %339
        %343 = vset.pattern.permute.xlu0 0
        %344 = vperm.xlu0 %343, %v336
        %v345 = vpop.permute.xlu0 %344
        %vm347 = vcmask 97280
        %v349 = vsel %vm347, %v333, 0
        %v352 = vsel %vm347, %v334, 0
        %vm354 = vcmask 1043456
        %v356 = vsel %vm354, %v332, 0
        %358 = vmatprep.subr.mxu0 0.0
        %359 = vmatpush1.msra.mxu0 %v331
        %360 = vmatprep.subr.mxu0 0.0
        %361 = vmatpush1.msra.mxu0 %v356
        %362 = vmatprep.subr.mxu0 0.0
        %363 = vmatpush1.msra.mxu0 0.0
        %364 = vmatprep.subr.mxu0 0.0
        %365 = vmatpush1.msra.mxu0 0.0
        %366 = vmatprep.subr.mxu0 0.0
        %367 = vmatpush1.msra.mxu0 0.0
        %368 = vmatprep.subr.mxu0 0.0
        %369 = vmatpush1.msra.mxu0 0.0
        %370 = vmatprep.subr.mxu0 0.0
        %371 = vmatpush1.msra.mxu0 0.0
        %372 = vmatprep.subr.mxu0 0.0
        %373 = vmatpush1.msra.mxu0 0.0
        %374 = vmatprep.subr.mxu0 0.0
        %375 = vmatpush1.msra.mxu0 0.0
        %376 = vmatprep.subr.mxu0 0.0
        %377 = vmatpush1.msra.mxu0 0.0
        %378 = vmatprep.subr.mxu0 0.0
        %379 = vmatpush1.msra.mxu0 0.0
        %380 = vmatprep.subr.mxu0 0.0
        %381 = vmatpush1.msra.mxu0 0.0
        %382 = vmatprep.subr.mxu0 0.0
        %383 = vmatpush1.msra.mxu0 0.0
        %384 = vmatprep.subr.mxu0 0.0
        %385 = vmatpush1.msra.mxu0 0.0
        %386 = vmatprep.subr.mxu0 0.0
        %387 = vmatpush1.msra.mxu0 0.0
        %388 = vmatprep.subr.mxu0 0.0
        %389 = vmatpush1.msra.mxu0 0.0
        %390 = vmatprep.subr.mxu0 0.0
        %391 = vmatpush1.msra.mxu0 0.0
        %392 = vmatprep.subr.mxu0 0.0
        %393 = vmatpush1.msra.mxu0 0.0
        %394 = vmatprep.subr.mxu0 0.0
        %395 = vmatpush1.msra.mxu0 0.0
        %396 = vmatprep.subr.mxu0 0.0
        %397 = vmatpush1.msra.mxu0 0.0
        %398 = vmatprep.subr.mxu0 0.0
        %399 = vmatpush1.msra.mxu0 0.0
        %400 = vmatprep.subr.mxu0 0.0
        %401 = vmatpush1.msra.mxu0 0.0
        %402 = vmatprep.subr.mxu0 0.0
        %403 = vmatpush1.msra.mxu0 0.0
        %404 = vmatprep.subr.mxu0 0.0
        %405 = vmatpush1.msra.mxu0 0.0
        %406 = vmatprep.subr.mxu0 0.0
        %407 = vmatpush1.msra.mxu0 0.0
        %408 = vmatprep.subr.mxu0 0.0
        %409 = vmatpush1.msra.mxu0 0.0
        %410 = vmatprep.subr.mxu0 0.0
        %411 = vmatpush1.msra.mxu0 0.0
        %412 = vmatprep.subr.mxu0 0.0
        %413 = vmatpush1.msra.mxu0 0.0
        %414 = vmatprep.subr.mxu0 0.0
        %415 = vmatpush1.msra.mxu0 0.0
        %416 = vmatprep.subr.mxu0 0.0
        %417 = vmatpush1.msra.mxu0 0.0
        %418 = vmatprep.subr.mxu0 0.0
        %419 = vmatpush1.msra.mxu0 0.0
        %420 = vmatprep.subr.mxu0 0.0
        %421 = vmatpush1.msra.mxu0 0.0
        %422 = vmatprep.mubr.f32.mxu0 0.0
        %423 = vmatmul.mubr.f32.gmra.mrb[0].mxu0 %v349
        %v424 = vpop.f32.mrb[0].mxu0
        %v425 = vadd.f32 %v340, %v424
        %v426 = vpop.f32.mrb[0].mxu0
        %427 = vmatprep.mubr.f32.mxu0 0.0
        %428 = vmatmul.mubr.f32.gmra.mrb[0].mxu0 %v352
        %v429 = vpop.f32.mrb[0].mxu0
        %v430 = vadd.f32 %v345, %v429
        %v431 = vpop.f32.mrb[0].mxu0
        %432 = vdwg.mxu0
        %v433 = vxor.u32 %v430, 2147483648
        %v434 = vmul.f32 %v433, 1.442695
        %v435 = vpow.pop %v434
        %v436 = vadd.f32 %v435, 1.0
        %v437 = vrcp.pop %v436
        %v438 = vmul.f32 1.0, %v437
        %v439 = vmul.f32 %v425, %v438
        %440 = vst [vmem:[%s300] sm:$0xff] %v439
        %s441 = sand.u32 %s145, 1
        %s442 = scalar_lea.sflag [#allocation5], %s441
        %s443 = sand.u32 %s145, 1
        %s444 = smul.addr %s443, 8
        %s445 = scalar_lea.vmem [#allocation11], %s444
        // Predicated region
        $region53: #{tpu_custom_call.1} parent=35 // pred_check
          %p446 = pneg %p155
        $region54: #{tpu_custom_call.1} parent=35 // pred_check_branch
          %448 = sbr.rel (%p446) target = $region56
        $region55: #{tpu_custom_call.1} parent=35 // pred_region
          %s450 = ssub.s32 128, 128
          %451 = vsyncadd %s442, %s450
          %s452 = smul.addr %s29, 2
          %s453 = sadd.s32 %s30, %s452
          %s454 = smul.addr %s453, 128
          %s455 = scalar_lea.hbm %s4, %s454
          %s457 = sshll.u32 %s445, 4
          %s458 = int_to_ptr.vmem [resolvable:$true] %s457
          %460 = dma.vmem_to_hbm [thread:$0]  %s458, 128, %s455, %s442
        $region56: #{tpu_custom_call.1} parent=35 // pred_fallthru
          _
      $region36: #{tpu_custom_call.1} parent=5 // pred_fallthru
        _
      %p461 = scmp.le.s32.totalorder 2, %s20
      // Predicated region
      $region57: #{tpu_custom_call.1} parent=5 // pred_check
        %p462 = pneg %p461
      $region58: #{tpu_custom_call.1} parent=5 // pred_check_branch
        %464 = sbr.rel (%p462) target = $region60
      $region59: #{tpu_custom_call.1} parent=5 // pred_region
        %s465 = ssub.s32 %s20, 2
        // Predicated region
        $region61: #{tpu_custom_call.1} parent=59 // pred_check
          %p466 = pneg %p161
        $region62: #{tpu_custom_call.1} parent=59 // pred_check_branch
          %468 = sbr.rel (%p466) target = $region64
        $region63: #{tpu_custom_call.1} parent=59 // pred_region
          %s469 = sand.u32 %s146, 1
          %s470 = scalar_lea.sflag [#allocation5], %s469
          %s471 = sand.u32 %s146, 1
          %s472 = smul.addr %s471, 8
          %s473 = scalar_lea.vmem [#allocation11], %s472
          %474 = dma.done %s470, 128
        $region64: #{tpu_custom_call.1} parent=59 // pred_fallthru
          _
      $region60: #{tpu_custom_call.1} parent=5 // pred_fallthru
        _
    $region6: #{tpu_custom_call.1} parent=1 // loop_footer
      %s24 = sadd.s32 1, %s20
    $region7: #{tpu_custom_call.1} parent=1 // loop_footer_branch
      %19 = sbr.rel target = $region3
    $region8: #{tpu_custom_call.1} parent=1 // loop_exit
      _
    %475 = vsyncpa [#allocation4], 1
    %s476 = scalar_lea.sflag [#allocation4], 1
    %477 = vsyncpa %s476, 1
    %478 = vsyncpa [#allocation7], 1
    %s479 = scalar_lea.sflag [#allocation7], 1
    %480 = vsyncpa %s479, 1
    %481 = vsyncpa [#allocation10], 1
    %482 = vsyncpa [#allocation5], 1
    %s483 = scalar_lea.sflag [#allocation5], 1
    %484 = vsyncpa %s483, 1

</llo_original>
